<compile_context>
chip_gen: v6e
topology: v6e:2x2x1
jax: 0.10.0
libtpu: 0.0.40
codegen_flags: <defaults>
</compile_context>

<pallas_src>
import functools
import math

import jax
import jax.numpy as jnp
from jax.experimental import pallas as pl
from jax.experimental.pallas import tpu as pltpu


def _norm_kernel(x_ref, alpha_ref, bias_ref, o_ref, *, d_model, eps):
    x = x_ref[...].astype(jnp.float32)                       # (tile_rows, D)

    # Fused single-pass reduction: sum and sum-of-squares (f32 accumulation).
    s = jnp.sum(x, axis=-1, keepdims=True)                   # (tile_rows, 1)
    ss = jnp.sum(x * x, axis=-1, keepdims=True)              # (tile_rows, 1)
    mean = s * (1.0 / d_model)
    # Unbiased variance (ddof=1), matching torch.Tensor.std default.
    var = (ss - d_model * (mean * mean)) * (1.0 / (d_model - 1))
    var = jnp.maximum(var, 0.0)          # guard tiny negatives from cancellation
    std = jnp.sqrt(var)

    # Per-row reciprocal (tile_rows values only) instead of a full-tile divide.
    inv = pl.reciprocal(std + eps, approx=False)              # (tile_rows, 1)

    alpha = alpha_ref[...]                                    # (1, D) f32
    bias = bias_ref[...]                                      # (1, D) f32
    out = (x - mean) * (alpha * inv) + bias
    o_ref[...] = out.astype(o_ref.dtype)


def _round_up(v, m):
    return ((v + m - 1) // m) * m


def _pick_tile_rows(rows, d_model, itemsize):
    """Auto-size the row tile for a memory-bound normalization kernel."""
    # Sublane packing for the I/O dtype: 8 f32, 16 bf16, 32 int8/fp8.
    pack = {4: 8, 2: 16, 1: 32}.get(itemsize, 8)
    row_bytes = max(1, d_model * itemsize)

    def rows_for_bytes(nbytes):
        r = nbytes // row_bytes
        return max(pack, (r // pack) * pack)

    rows_padded = _round_up(max(rows, 1), pack)

    # Largest useful block ~2 MiB: double-buffered in + out blocks plus the
    # f32 elementwise temporaries fit comfortably in the 32 MiB scoped-VMEM
    # budget on v5e / v6e / v7x, and elementwise kernels already sit near the
    # HBM roofline at 1-2 MiB blocks.
    tile = min(rows_for_bytes(2 * 1024 * 1024), rows_padded)

    # For problems big enough, keep >= 4 grid steps so DMA prefetch/writeback
    # overlaps compute — but never shrink a block below ~512 KiB to do it
    # (per-step overhead ~0.35 us would start to show).
    steps = pl.cdiv(rows_padded, tile)
    if steps < 4:
        want = max(rows_for_bytes(512 * 1024),
                   _round_up(pl.cdiv(rows_padded, 4), pack))
        tile = min(tile, want)

    return max(pack, min(tile, rows_padded))


def norm_pallas(x, alpha, bias, eps=1e-6, *, tile_rows=None):
    """x: (..., d_model); alpha, bias: (d_model,)."""
    orig_shape = x.shape
    d_model = orig_shape[-1]
    assert d_model >= 2, "unbiased std (ddof=1) requires d_model >= 2"
    rows = math.prod(orig_shape[:-1]) if len(orig_shape) > 1 else 1

    x2 = x.reshape(rows, d_model)
    # Cast params to f32 once here so the kernel hot path skips per-step casts.
    alpha2 = alpha.astype(jnp.float32).reshape(1, d_model)
    bias2 = bias.astype(jnp.float32).reshape(1, d_model)

    itemsize = jnp.dtype(x.dtype).itemsize
    if tile_rows is None:
        tile_rows = _pick_tile_rows(rows, d_model, itemsize)

    # Ragged last tile is handled by Pallas (padded reads / masked writes);
    # rows are independent so padded rows never contaminate valid output.
    grid = (pl.cdiv(rows, tile_rows),)

    kernel = functools.partial(_norm_kernel, d_model=d_model, eps=eps)

    out = pl.pallas_call(
        kernel,
        out_shape=jax.ShapeDtypeStruct((rows, d_model), x.dtype),
        grid_spec=pltpu.PrefetchScalarGridSpec(
            num_scalar_prefetch=0,
            grid=grid,
            in_specs=[
                pl.BlockSpec((tile_rows, d_model), lambda i: (i, 0)),
                pl.BlockSpec((1, d_model), lambda i: (0, 0)),
                pl.BlockSpec((1, d_model), lambda i: (0, 0)),
            ],
            out_specs=pl.BlockSpec((tile_rows, d_model), lambda i: (i, 0)),
        ),
        compiler_params=pltpu.CompilerParams(
            dimension_semantics=("parallel",),
            vmem_limit_bytes=32 * 1024 * 1024,
        ),
        cost_estimate=pl.CostEstimate(
            flops=7 * rows * d_model,
            transcendentals=2 * rows,
            bytes_accessed=2 * rows * d_model * itemsize + 2 * d_model * 4,
        ),
    )(x2, alpha2, bias2)
    return out.reshape(orig_shape)


def norm_ref(x, alpha, bias, eps=1e-6):
    """Pure-JAX reference mirroring the PyTorch forward (unbiased std)."""
    mean = jnp.mean(x, axis=-1, keepdims=True)
    xc = x - mean
    var = jnp.sum(xc * xc, axis=-1, keepdims=True) / (x.shape[-1] - 1)
    std = jnp.sqrt(var)
    return alpha * xc / (std + eps) + bias


if __name__ == "__main__":
    key = jax.random.PRNGKey(0)
    batch, seq, d_model = 2, 8, 32

    x = jax.random.normal(key, (batch, seq, d_model), dtype=jnp.float32)
    # Deterministic parameter init matching nn.Parameter(ones) / (zeros).
    alpha = jnp.ones((d_model,), dtype=jnp.float32)
    bias = jnp.zeros((d_model,), dtype=jnp.float32)

    out = jax.block_until_ready(norm_pallas(x, alpha, bias))
    ref = norm_ref(x, alpha, bias)
    assert out.shape == x.shape
    assert jnp.allclose(out, ref, atol=1e-5, rtol=1e-5), "mismatch vs reference"

    # Ragged row count (batch*seq not divisible by the sublane pack): exercises
    # the cdiv grid + masked last tile path.
    x2 = jax.random.normal(jax.random.PRNGKey(1), (3, 5, d_model), dtype=jnp.float32)
    out2 = jax.block_until_ready(norm_pallas(x2, alpha, bias))
    ref2 = norm_ref(x2, alpha, bias)
    assert jnp.allclose(out2, ref2, atol=1e-5, rtol=1e-5), "mismatch vs reference (ragged)"

    print("KERNEL_OK")
</pallas_src>

<mosaic_0001>
module attributes {stable_mosaic.version = 11 : i64} {
  func.func @_norm_kernel(%arg0: i32, %arg1: memref<16x32xf32, #tpu.memory_space<vmem>>, %arg2: memref<1x32xf32, #tpu.memory_space<vmem>>, %arg3: memref<1x32xf32, #tpu.memory_space<vmem>>, %arg4: memref<16x32xf32, #tpu.memory_space<vmem>>) attributes {dimension_semantics = [#tpu.dimension_semantics<parallel>], iteration_bounds = array<i64: 1>, scalar_prefetch = 0 : i64, scratch_operands = 0 : i64, tpu.core_type = #tpu.core_type<tc>, window_params = [{transform_indices = @transform_0, window_bounds = array<i64: 16, 32>}, {pipeline_mode = #tpu.pipeline_mode<synchronous>, transform_indices = @transform_1, window_bounds = array<i64: 1, 32>}, {pipeline_mode = #tpu.pipeline_mode<synchronous>, transform_indices = @transform_2, window_bounds = array<i64: 1, 32>}, {transform_indices = @transform_3, window_bounds = array<i64: 16, 32>}]} {
    %c0 = arith.constant 0 : index
    %c0_0 = arith.constant 0 : index
    %0 = vector.load %arg1[%c0, %c0_0] : memref<16x32xf32, #tpu.memory_space<vmem>>, vector<16x32xf32>
    %cst = arith.constant dense<0.000000e+00> : vector<16xf32>
    %1 = vector.multi_reduction <add>, %0, %cst [1] : vector<16x32xf32> to vector<16xf32>
    %2 = vector.shape_cast %1 : vector<16xf32> to vector<16x1xf32>
    %3 = arith.mulf %0, %0 : vector<16x32xf32>
    %cst_1 = arith.constant dense<0.000000e+00> : vector<16xf32>
    %4 = vector.multi_reduction <add>, %3, %cst_1 [1] : vector<16x32xf32> to vector<16xf32>
    %5 = vector.shape_cast %4 : vector<16xf32> to vector<16x1xf32>
    %cst_2 = arith.constant 3.125000e-02 : f32
    %6 = vector.broadcast %cst_2 : f32 to vector<16x1xf32>
    %7 = arith.mulf %2, %6 : vector<16x1xf32>
    %8 = arith.mulf %7, %7 : vector<16x1xf32>
    %cst_3 = arith.constant 3.200000e+01 : f32
    %9 = vector.broadcast %cst_3 : f32 to vector<16x1xf32>
    %10 = arith.mulf %9, %8 : vector<16x1xf32>
    %11 = arith.subf %5, %10 : vector<16x1xf32>
    %cst_4 = arith.constant 0.0322580636 : f32
    %12 = vector.broadcast %cst_4 : f32 to vector<16x1xf32>
    %13 = arith.mulf %11, %12 : vector<16x1xf32>
    %cst_5 = arith.constant 0.000000e+00 : f32
    %14 = vector.broadcast %cst_5 : f32 to vector<16x1xf32>
    %15 = arith.maximumf %13, %14 : vector<16x1xf32>
    %16 = math.sqrt %15 : vector<16x1xf32>
    %cst_6 = arith.constant 9.99999997E-7 : f32
    %17 = vector.broadcast %cst_6 : f32 to vector<16x1xf32>
    %18 = arith.addf %16, %17 : vector<16x1xf32>
    %19 = tpu.reciprocal %18 : vector<16x1xf32> -> vector<16x1xf32>
    %c0_7 = arith.constant 0 : index
    %c0_8 = arith.constant 0 : index
    %20 = vector.load %arg2[%c0_7, %c0_8] : memref<1x32xf32, #tpu.memory_space<vmem>>, vector<1x32xf32>
    %c0_9 = arith.constant 0 : index
    %c0_10 = arith.constant 0 : index
    %21 = vector.load %arg3[%c0_9, %c0_10] : memref<1x32xf32, #tpu.memory_space<vmem>>, vector<1x32xf32>
    %22 = vector.broadcast %7 : vector<16x1xf32> to vector<16x32xf32>
    %23 = arith.subf %0, %22 : vector<16x32xf32>
    %24 = vector.broadcast %20 : vector<1x32xf32> to vector<16x32xf32>
    %25 = vector.broadcast %19 : vector<16x1xf32> to vector<16x32xf32>
    %26 = arith.mulf %24, %25 : vector<16x32xf32>
    %27 = arith.mulf %23, %26 : vector<16x32xf32>
    %28 = vector.broadcast %21 : vector<1x32xf32> to vector<16x32xf32>
    %29 = arith.addf %27, %28 : vector<16x32xf32>
    %c0_11 = arith.constant 0 : index
    %c0_12 = arith.constant 0 : index
    %30 = vector.load %arg4[%c0_11, %c0_12] : memref<16x32xf32, #tpu.memory_space<vmem>>, vector<16x32xf32>
    tpu.vector_store %arg4[%c0_11, %c0_12], %29 {strides = array<i32>} : memref<16x32xf32, #tpu.memory_space<vmem>>, vector<16x32xf32>,
    return
  }
  func.func @transform_0(%arg0: i32) -> (i32, i32) {
    %c0_i32 = arith.constant 0 : i32
    %c0_i32_0 = arith.constant 0 : i32
    return %arg0, %c0_i32 : i32, i32
  }
  func.func @transform_1(%arg0: i32) -> (i32, i32) {
    %c0_i32 = arith.constant 0 : i32
    %c0_i32_0 = arith.constant 0 : i32
    %c0_i32_1 = arith.constant 0 : i32
    return %c0_i32, %c0_i32_0 : i32, i32
  }
  func.func @transform_2(%arg0: i32) -> (i32, i32) {
    %c0_i32 = arith.constant 0 : i32
    %c0_i32_0 = arith.constant 0 : i32
    %c0_i32_1 = arith.constant 0 : i32
    return %c0_i32, %c0_i32_0 : i32, i32
  }
  func.func @transform_3(%arg0: i32) -> (i32, i32) {
    %c0_i32 = arith.constant 0 : i32
    %c0_i32_0 = arith.constant 0 : i32
    return %arg0, %c0_i32 : i32, i32
  }
}

</mosaic_0001>

<llo_original>
// kernel: tpu_custom_call.1
$region0: #{tpu_custom_call.1}
  #allocation0 [shape = 'u32[]', space=smem, size = 0x4, offset = 0x4, fixed_abs, tag = 'smem constant byte address 0x4 - core index']
  #allocation1 [shape = 'u32[144,128]{1,0:T(1,128)}', space=vmem, size = 0x12000, scoped, tag = 'internal scratch']
  %s0 = inlined_call_operand.hbm [shape: f32[16,32], index: 0, kind: input, shape index: {}]
  %s1 = inlined_call_operand.vmem [shape: f32[1,32], index: 1, kind: input, shape index: {}]
  %s2 = inlined_call_operand.vmem [shape: f32[1,32], index: 2, kind: input, shape index: {}]
  %s3 = inlined_call_operand.hbm [shape: f32[16,32], index: 3, kind: output, shape index: {}]
  %s4 = sld [smem:[#allocation0]]
  $region26: #{tpu_custom_call.1} parent=0
    _
  %s6 = ssub.s32 1, %s4
  %s7 = scalar_select 0, %s6, %s4
  $region1: #{tpu_custom_call.1} parent=0
    #allocation2 [shape = 'u8[8192]{0}', space=vmem, size = 0x2000, scoped, tag = 'input window, operand 0, single buffered']
    #allocation3 [shape = 's32[1]{0}', space=sflag, size = 0x4, scoped, tag = 'scoped memory for tpu_custom_call.1']
    #allocation4 [shape = 's32[1]{0}', space=sflag, size = 0x4, scoped, tag = 'scoped memory for tpu_custom_call.1']
    #allocation5 [shape = 'u8[8192]{0}', space=vmem, size = 0x2000, scoped, tag = 'output window, operand 0, single buffered']
    %8 = vsyncpa [#allocation3], 0
    %9 = vsyncpa [#allocation4], 0
    // Predicated region
    $region2: #{tpu_custom_call.1} parent=1 // pred_check
      _
    $region3: #{tpu_custom_call.1} parent=1 // pred_check_branch
      %11 = sbr.rel (0) target = $region5
    $region4: #{tpu_custom_call.1} parent=1 // pred_region
      %s13 = ssub.s32 256, 256
      %14 = vsyncadd [#allocation3], %s13
      %s15 = sshll.u32 [#allocation2], 4
      %s16 = int_to_ptr.vmem [resolvable:$true] %s15
      %21 = dma.hbm_to_vmem [thread:$0]  %s0, 256, %s16, [#allocation3], 128, 128, 8
    $region5: #{tpu_custom_call.1} parent=1 // pred_fallthru
      _
    // Predicated region
    $region6: #{tpu_custom_call.1} parent=1 // pred_check
      _
    $region7: #{tpu_custom_call.1} parent=1 // pred_check_branch
      %23 = sbr.rel (0) target = $region9
    $region8: #{tpu_custom_call.1} parent=1 // pred_region
      _
    $region9: #{tpu_custom_call.1} parent=1 // pred_fallthru
      _
    // Predicated region
    $region10: #{tpu_custom_call.1} parent=1 // pred_check
      _
    $region11: #{tpu_custom_call.1} parent=1 // pred_check_branch
      %25 = sbr.rel (0) target = $region13
    $region12: #{tpu_custom_call.1} parent=1 // pred_region
      _
    $region13: #{tpu_custom_call.1} parent=1 // pred_fallthru
      _
    // Predicated region
    $region14: #{tpu_custom_call.1} parent=1 // pred_check
      _
    $region15: #{tpu_custom_call.1} parent=1 // pred_check_branch
      %27 = sbr.rel (0) target = $region17
    $region16: #{tpu_custom_call.1} parent=1 // pred_region
      %28 = dma.done [#allocation3], 256
    $region17: #{tpu_custom_call.1} parent=1 // pred_fallthru
      _
    %v29 = vld [vmem:[#allocation2] sm:$0xff]
    %v30 = vld [vmem:[#allocation2 + $0x8] sm:$0xff]
    %vm31 = vcmask 261120
    %v32 = vsel %vm31, %v29, 0.0
    %33 = vadd.xlane.f32.xlu0 %v32
    %v34 = vpop.xlane.xlu0 %33
    %v35 = vsel %vm31, %v30, 0.0
    %36 = vadd.xlane.f32.xlu0 %v35
    %v37 = vpop.xlane.xlu0 %36
    %v38 = vmul.f32 %v29, %v29
    %v39 = vmul.f32 %v30, %v30
    %v40 = vsel %vm31, %v38, 0.0
    %41 = vadd.xlane.f32.xlu0 %v40
    %v42 = vpop.xlane.xlu0 %41
    %v43 = vsel %vm31, %v39, 0.0
    %44 = vadd.xlane.f32.xlu0 %v43
    %v45 = vpop.xlane.xlu0 %44
    %v46 = vmul.f32 %v34, 0.03125
    %v47 = vmul.f32 %v37, 0.03125
    %v48 = vmul.f32 %v46, %v46
    %v49 = vmul.f32 %v47, %v47
    %v50 = vmul.f32 %v48, 32.0
    %v51 = vmul.f32 %v49, 32.0
    %v52 = vsub.f32 %v42, %v50
    %v53 = vsub.f32 %v45, %v51
    %v54 = vmul.f32 %v52, 0.032258064
    %v55 = vmul.f32 %v53, 0.032258064
    %v56 = vmax.f32 %v54, 0.0
    %v57 = vmax.f32 %v55, 0.0
    %v58 = vrsqrt.pop %v56
    %v59 = vmul.f32 %v56, %v58
    %vm60 = vcmp.eq.f32.partialorder %v56, inf
    %v61 = vsel %vm60, %v56, %v59
    %vm62 = vcmp.eq.f32.partialorder %v56, 0.0
    %v63 = vand.u32 %v56, 2147483648
    %v64 = vsel %vm62, %v63, %v61
    %v65 = vrsqrt.pop %v57
    %v66 = vmul.f32 %v57, %v65
    %vm67 = vcmp.eq.f32.partialorder %v57, inf
    %v68 = vsel %vm67, %v57, %v66
    %vm69 = vcmp.eq.f32.partialorder %v57, 0.0
    %v70 = vand.u32 %v57, 2147483648
    %v71 = vsel %vm69, %v70, %v68
    %v72 = vadd.f32 %v64, 1e-06
    %v73 = vadd.f32 %v71, 1e-06
    %v74 = vrcp.pop %v72
    %v75 = vrcp.pop %v73
    %v76 = vld [vmem:[%s1] sm:$0x1]
    %v77 = vld [vmem:[%s2] sm:$0x1]
    %v78 = vsub.f32 %v29, %v46
    %v79 = vsub.f32 %v30, %v47
    %v81 = vlaneseq
    %v82 = vshrl.u32 %v81, 7
    %v83 = vsub.s32 0, %v82
    %v84 = vrot.slane %v76, %v83
    %v86 = vmul.f32 %v84, %v74
    %v87 = vmul.f32 %v84, %v75
    %v88 = vmul.f32 %v78, %v86
    %v89 = vmul.f32 %v79, %v87
    %v91 = vlaneseq
    %v92 = vshrl.u32 %v91, 7
    %v93 = vsub.s32 0, %v92
    %v94 = vrot.slane %v77, %v93
    %v96 = vadd.f32 %v88, %v94
    %v97 = vadd.f32 %v89, %v94
    %98 = vst.msk [vmem:[#allocation5] sm:$0xff] %vm31, %v96
    %99 = vst.msk [vmem:[#allocation5 + $0x8] sm:$0xff] %vm31, %v97
    // Predicated region
    $region18: #{tpu_custom_call.1} parent=1 // pred_check
      _
    $region19: #{tpu_custom_call.1} parent=1 // pred_check_branch
      %101 = sbr.rel (0) target = $region21
    $region20: #{tpu_custom_call.1} parent=1 // pred_region
      %s103 = ssub.s32 256, 256
      %104 = vsyncadd [#allocation4], %s103
      %s105 = sshll.u32 [#allocation5], 4
      %s106 = int_to_ptr.vmem [resolvable:$true] %s105
      %111 = dma.vmem_to_hbm [thread:$0]  %s106, 256, %s3, [#allocation4], 128, 128, 8
    $region21: #{tpu_custom_call.1} parent=1 // pred_fallthru
      _
    // Predicated region
    $region22: #{tpu_custom_call.1} parent=1 // pred_check
      _
    $region23: #{tpu_custom_call.1} parent=1 // pred_check_branch
      %113 = sbr.rel (0) target = $region25
    $region24: #{tpu_custom_call.1} parent=1 // pred_region
      %114 = dma.done [#allocation4], 256
    $region25: #{tpu_custom_call.1} parent=1 // pred_fallthru
      _
    %115 = vsyncpa [#allocation3], 1
    %116 = vsyncpa [#allocation4], 1

</llo_original>
